<compile_context>
chip_gen: v7x
topology: tpu7x:2x2x1
jax: 0.10.0
libtpu: 0.0.40
codegen_flags: <defaults>
</compile_context>

<pallas_src>
import jax
import jax.numpy as jnp
from jax.experimental import pallas as pl
from jax.experimental.pallas import tpu as pltpu

# Environment-derived constants (Pendulum-v1 style continuous-control env).
NUM_STATES = 3        # env.observation_space.shape[0]
ACTION_DIM = 1        # env.action_space.shape[0]
HIDDEN = 100
HEADS = 2 * ACTION_DIM  # fused mu/std head width


def actor_kernel(s_ref, w1_ref, b1_ref, wh_ref, bh_ref, out_ref):
    s = s_ref[...]                        # [NUM_STATES, TB]  (batch on lanes)
    w1 = w1_ref[...]                      # [HIDDEN, NUM_STATES]

    # fc1 on the VPU: K = NUM_STATES (=3) is far too small for a useful MXU
    # pass.  w1[:, k:k+1] is a constant-cost broadcast along lanes; s[k:k+1, :]
    # is a cheap sublane broadcast.  Unrolled at trace time.
    h = b1_ref[...] + w1[:, 0:1] * s[0:1, :]           # [HIDDEN, TB]
    for k in range(1, NUM_STATES):
        h = h + w1[:, k:k + 1] * s[k:k + 1, :]
    h = jnp.maximum(h, 0.0)

    # Fused mu/std head: [HEADS, HIDDEN] @ [HIDDEN, TB] -> lane-dense [HEADS, TB].
    z = jnp.dot(wh_ref[...], h, preferred_element_type=jnp.float32) + bh_ref[...]

    # Separate activations per head row: no redundant tanh/sigmoid, no select.
    out_ref[0:ACTION_DIM, :] = jnp.tanh(z[0:ACTION_DIM, :]) * 2.0
    out_ref[ACTION_DIM:HEADS, :] = jax.nn.sigmoid(z[ACTION_DIM:HEADS, :])


def _round_up(x, m):
    return (x + m - 1) // m * m


def _cdiv(x, m):
    return (x + m - 1) // m


def pack_actor_params(params):
    """Build the kernel-oriented fused parameters ONCE (off the hot path)."""
    w1, b1, wmu, bmu, wstd, bstd = params
    w1_t = jnp.asarray(w1.T)                                  # [HIDDEN, NUM_STATES]
    b1_t = jnp.asarray(b1.reshape(HIDDEN, 1))                 # [HIDDEN, 1]
    wh_t = jnp.concatenate([wmu.T, wstd.T], axis=0)           # [HEADS, HIDDEN]
    bh_t = jnp.concatenate([bmu.reshape(ACTION_DIM, 1),
                            bstd.reshape(ACTION_DIM, 1)], axis=0)  # [HEADS, 1]
    return (w1_t, b1_t, wh_t, bh_t)


def actor_forward(state, packed_params, *, block_batch=2048):
    """state: [B, NUM_STATES] f32 -> (mu [B, ACTION_DIM], std [B, ACTION_DIM])."""
    w1_t, b1_t, wh_t, bh_t = packed_params
    B = state.shape[0]

    # Lane-dense batch tile: multiple of 128, large to amortize grid-step
    # overhead, but capped so the grid has >= 2 blocks whenever the batch
    # spans more than one lane tile (keeps both v7x TensorCores busy).
    b128 = _round_up(B, 128)
    tb = min(block_batch, b128)
    if b128 > 128:
        tb = min(tb, _round_up(_cdiv(b128, 2), 128))
    tb = _round_up(tb, 128)
    Bp = _round_up(B, tb)

    s_t = state.T                                             # [NUM_STATES, B]
    if Bp != B:
        s_t = jnp.pad(s_t, ((0, 0), (0, Bp - B)))             # padded lanes -> garbage, sliced off

    out = pl.pallas_call(
        actor_kernel,
        out_shape=jax.ShapeDtypeStruct((HEADS, Bp), jnp.float32),
        grid=(Bp // tb,),
        in_specs=[
            pl.BlockSpec((NUM_STATES, tb), lambda i: (0, i)),      # state tile (lane-dense)
            pl.BlockSpec((HIDDEN, NUM_STATES), lambda i: (0, 0)),  # w1^T (resident)
            pl.BlockSpec((HIDDEN, 1), lambda i: (0, 0)),           # b1
            pl.BlockSpec((HEADS, HIDDEN), lambda i: (0, 0)),       # fused head W^T
            pl.BlockSpec((HEADS, 1), lambda i: (0, 0)),            # fused head b
        ],
        out_specs=pl.BlockSpec((HEADS, tb), lambda i: (0, i)),     # lane-dense output
        compiler_params=pltpu.CompilerParams(
            dimension_semantics=("parallel",)),
    )(s_t, w1_t, b1_t, wh_t, bh_t)

    out = out[:, :B]                                               # drop padded lanes
    return out[:ACTION_DIM, :].T, out[ACTION_DIM:, :].T


def init_params(key):
    """Deterministic init mirroring PyTorch Linear default: U(-1/sqrt(fan_in), +)."""
    ks = jax.random.split(key, 6)

    def uniform(k, shape, fan_in):
        bound = 1.0 / jnp.sqrt(float(fan_in))
        return jax.random.uniform(k, shape, jnp.float32, -bound, bound)

    w1 = uniform(ks[0], (NUM_STATES, HIDDEN), NUM_STATES)
    b1 = uniform(ks[1], (1, HIDDEN), NUM_STATES)
    wmu = uniform(ks[2], (HIDDEN, ACTION_DIM), HIDDEN)
    bmu = uniform(ks[3], (1, ACTION_DIM), HIDDEN)
    wstd = uniform(ks[4], (HIDDEN, ACTION_DIM), HIDDEN)
    bstd = uniform(ks[5], (1, ACTION_DIM), HIDDEN)
    return (w1, b1, wmu, bmu, wstd, bstd)


if __name__ == "__main__":
    key = jax.random.PRNGKey(0)
    pkey, skey_small, skey_big = jax.random.split(key, 3)

    params = init_params(pkey)
    packed = pack_actor_params(params)          # hoisted out of the hot path
    w1, b1, wmu, bmu, wstd, bstd = params

    def reference(s):
        h = jnp.maximum(s @ w1 + b1, 0.0)
        return jnp.tanh(h @ wmu + bmu) * 2.0, jax.nn.sigmoid(h @ wstd + bstd)

    # Small batch (single 128-lane block) and a non-multiple-of-128 batch
    # (lane padding + 2-block parallel grid).
    for batch, sk in ((8, skey_small), (260, skey_big)):
        state = jax.random.normal(sk, (batch, NUM_STATES), jnp.float32)
        mu, std = actor_forward(state, packed)
        jax.block_until_ready((mu, std))

        mu_ref, std_ref = reference(state)
        assert mu.shape == (batch, ACTION_DIM) and std.shape == (batch, ACTION_DIM)
        assert jnp.allclose(mu, mu_ref, atol=1e-5), f"mu mismatch (B={batch})"
        assert jnp.allclose(std, std_ref, atol=1e-5), f"std mismatch (B={batch})"

    print("KERNEL_OK")
</pallas_src>

<mosaic_0001>
module attributes {stable_mosaic.version = 11 : i64} {
  func.func @actor_kernel(%arg0: i32, %arg1: memref<3x128xf32, #tpu.memory_space<vmem>>, %arg2: memref<100x3xf32, #tpu.memory_space<vmem>>, %arg3: memref<100x1xf32, #tpu.memory_space<vmem>>, %arg4: memref<2x100xf32, #tpu.memory_space<vmem>>, %arg5: memref<2x1xf32, #tpu.memory_space<vmem>>, %arg6: memref<2x128xf32, #tpu.memory_space<vmem>>) attributes {dimension_semantics = [#tpu.dimension_semantics<parallel>], iteration_bounds = array<i64: 1>, scalar_prefetch = 0 : i64, scratch_operands = 0 : i64, tpu.core_type = #tpu.core_type<tc>, window_params = [{transform_indices = @transform_0, window_bounds = array<i64: 3, 128>}, {pipeline_mode = #tpu.pipeline_mode<synchronous>, transform_indices = @transform_1, window_bounds = array<i64: 100, 3>}, {pipeline_mode = #tpu.pipeline_mode<synchronous>, transform_indices = @transform_2, window_bounds = array<i64: 100, 1>}, {pipeline_mode = #tpu.pipeline_mode<synchronous>, transform_indices = @transform_3, window_bounds = array<i64: 2, 100>}, {pipeline_mode = #tpu.pipeline_mode<synchronous>, transform_indices = @transform_4, window_bounds = array<i64: 2, 1>}, {transform_indices = @transform_5, window_bounds = array<i64: 2, 128>}]} {
    %c0 = arith.constant 0 : index
    %c0_0 = arith.constant 0 : index
    %0 = vector.load %arg1[%c0, %c0_0] : memref<3x128xf32, #tpu.memory_space<vmem>>, vector<3x128xf32>
    %c0_1 = arith.constant 0 : index
    %c0_2 = arith.constant 0 : index
    %1 = vector.load %arg2[%c0_1, %c0_2] : memref<100x3xf32, #tpu.memory_space<vmem>>, vector<100x3xf32>
    %c0_3 = arith.constant 0 : index
    %c0_4 = arith.constant 0 : index
    %2 = vector.load %arg3[%c0_3, %c0_4] : memref<100x1xf32, #tpu.memory_space<vmem>>, vector<100x1xf32>
    %3 = vector.extract_strided_slice %1 {offsets = [0, 0], sizes = [100, 1], strides = [1, 1]} : vector<100x3xf32> to vector<100x1xf32>
    %4 = vector.extract_strided_slice %0 {offsets = [0, 0], sizes = [1, 128], strides = [1, 1]} : vector<3x128xf32> to vector<1x128xf32>
    %5 = vector.broadcast %3 : vector<100x1xf32> to vector<100x128xf32>
    %6 = vector.broadcast %4 : vector<1x128xf32> to vector<100x128xf32>
    %7 = arith.mulf %5, %6 : vector<100x128xf32>
    %8 = vector.broadcast %2 : vector<100x1xf32> to vector<100x128xf32>
    %9 = arith.addf %8, %7 : vector<100x128xf32>
    %10 = vector.extract_strided_slice %1 {offsets = [0, 1], sizes = [100, 1], strides = [1, 1]} : vector<100x3xf32> to vector<100x1xf32>
    %11 = vector.extract_strided_slice %0 {offsets = [1, 0], sizes = [1, 128], strides = [1, 1]} : vector<3x128xf32> to vector<1x128xf32>
    %12 = vector.broadcast %10 : vector<100x1xf32> to vector<100x128xf32>
    %13 = vector.broadcast %11 : vector<1x128xf32> to vector<100x128xf32>
    %14 = arith.mulf %12, %13 : vector<100x128xf32>
    %15 = arith.addf %9, %14 : vector<100x128xf32>
    %16 = vector.extract_strided_slice %1 {offsets = [0, 2], sizes = [100, 1], strides = [1, 1]} : vector<100x3xf32> to vector<100x1xf32>
    %17 = vector.extract_strided_slice %0 {offsets = [2, 0], sizes = [1, 128], strides = [1, 1]} : vector<3x128xf32> to vector<1x128xf32>
    %18 = vector.broadcast %16 : vector<100x1xf32> to vector<100x128xf32>
    %19 = vector.broadcast %17 : vector<1x128xf32> to vector<100x128xf32>
    %20 = arith.mulf %18, %19 : vector<100x128xf32>
    %21 = arith.addf %15, %20 : vector<100x128xf32>
    %cst = arith.constant 0.000000e+00 : f32
    %22 = vector.broadcast %cst : f32 to vector<100x128xf32>
    %23 = arith.maximumf %21, %22 : vector<100x128xf32>
    %c0_5 = arith.constant 0 : index
    %c0_6 = arith.constant 0 : index
    %24 = vector.load %arg4[%c0_5, %c0_6] : memref<2x100xf32, #tpu.memory_space<vmem>>, vector<2x100xf32>
    %cst_7 = arith.constant dense<0.000000e+00> : vector<2x128xf32>
    %25 = tpu.matmul %24, %23, %cst_7 {dimension_numbers = #tpu.dot_dimension_numbers<[1], [0], [0], [1], [0, 0, 1, 1], [], []>} : vector<2x100xf32>, vector<100x128xf32>, vector<2x128xf32> -> vector<2x128xf32>
    %c0_8 = arith.constant 0 : index
    %c0_9 = arith.constant 0 : index
    %26 = vector.load %arg5[%c0_8, %c0_9] : memref<2x1xf32, #tpu.memory_space<vmem>>, vector<2x1xf32>
    %27 = vector.broadcast %26 : vector<2x1xf32> to vector<2x128xf32>
    %28 = arith.addf %25, %27 : vector<2x128xf32>
    %29 = vector.extract_strided_slice %28 {offsets = [0, 0], sizes = [1, 128], strides = [1, 1]} : vector<2x128xf32> to vector<1x128xf32>
    %30 = math.tanh %29 : vector<1x128xf32>
    %cst_10 = arith.constant 2.000000e+00 : f32
    %31 = vector.broadcast %cst_10 : f32 to vector<1x128xf32>
    %32 = arith.mulf %30, %31 : vector<1x128xf32>
    %c0_11 = arith.constant 0 : index
    %c0_12 = arith.constant 0 : index
    %33 = vector.load %arg6[%c0_11, %c0_12] : memref<2x128xf32, #tpu.memory_space<vmem>>, vector<1x128xf32>
    tpu.vector_store %arg6[%c0_11, %c0_12], %32 {strides = array<i32>} : memref<2x128xf32, #tpu.memory_space<vmem>>, vector<1x128xf32>,
    %34 = vector.extract_strided_slice %28 {offsets = [1, 0], sizes = [1, 128], strides = [1, 1]} : vector<2x128xf32> to vector<1x128xf32>
    %35 = arith.negf %34 : vector<1x128xf32>
    %36 = math.exp %35 : vector<1x128xf32>
    %cst_13 = arith.constant 1.000000e+00 : f32
    %37 = vector.broadcast %cst_13 : f32 to vector<1x128xf32>
    %38 = arith.addf %37, %36 : vector<1x128xf32>
    %39 = arith.divf %37, %38 : vector<1x128xf32>
    %c1 = arith.constant 1 : index
    %c0_14 = arith.constant 0 : index
    %40 = vector.load %arg6[%c1, %c0_14] : memref<2x128xf32, #tpu.memory_space<vmem>>, vector<1x128xf32>
    tpu.vector_store %arg6[%c1, %c0_14], %39 {strides = array<i32>} : memref<2x128xf32, #tpu.memory_space<vmem>>, vector<1x128xf32>,
    return
  }
  func.func @transform_0(%arg0: i32) -> (i32, i32) {
    %c0_i32 = arith.constant 0 : i32
    %c0_i32_0 = arith.constant 0 : i32
    return %c0_i32, %arg0 : i32, i32
  }
  func.func @transform_1(%arg0: i32) -> (i32, i32) {
    %c0_i32 = arith.constant 0 : i32
    %c0_i32_0 = arith.constant 0 : i32
    %c0_i32_1 = arith.constant 0 : i32
    return %c0_i32, %c0_i32_0 : i32, i32
  }
  func.func @transform_2(%arg0: i32) -> (i32, i32) {
    %c0_i32 = arith.constant 0 : i32
    %c0_i32_0 = arith.constant 0 : i32
    %c0_i32_1 = arith.constant 0 : i32
    return %c0_i32, %c0_i32_0 : i32, i32
  }
  func.func @transform_3(%arg0: i32) -> (i32, i32) {
    %c0_i32 = arith.constant 0 : i32
    %c0_i32_0 = arith.constant 0 : i32
    %c0_i32_1 = arith.constant 0 : i32
    return %c0_i32, %c0_i32_0 : i32, i32
  }
  func.func @transform_4(%arg0: i32) -> (i32, i32) {
    %c0_i32 = arith.constant 0 : i32
    %c0_i32_0 = arith.constant 0 : i32
    %c0_i32_1 = arith.constant 0 : i32
    return %c0_i32, %c0_i32_0 : i32, i32
  }
  func.func @transform_5(%arg0: i32) -> (i32, i32) {
    %c0_i32 = arith.constant 0 : i32
    %c0_i32_0 = arith.constant 0 : i32
    return %c0_i32, %arg0 : i32, i32
  }
}

</mosaic_0001>

<llo_original>
// kernel: tpu_custom_call.1
$region0: #{tpu_custom_call.1}
  #allocation0 [shape = 'u32[]', space=smem, size = 0x4, offset = 0x4, fixed_abs, tag = 'smem constant byte address 0x4 - core index']
  #allocation1 [shape = 'u32[144,128]{1,0:T(1,128)}', space=vmem, size = 0x12000, scoped, tag = 'internal scratch']
  %s0 = inlined_call_operand.vmem [shape: f32[3,128], index: 0, kind: input, shape index: {}]
  %s1 = inlined_call_operand.vmem [shape: f32[100,3], index: 1, kind: input, shape index: {}]
  %s2 = inlined_call_operand.vmem [shape: f32[100,1], index: 2, kind: input, shape index: {}]
  %s3 = inlined_call_operand.vmem [shape: f32[2,100], index: 3, kind: input, shape index: {}]
  %s4 = inlined_call_operand.vmem [shape: f32[2,1], index: 4, kind: input, shape index: {}]
  %s5 = inlined_call_operand.hbm [shape: f32[2,128], index: 5, kind: output, shape index: {}]
  %s6 = sld [smem:[#allocation0]]
  $region30: #{tpu_custom_call.1} parent=0
    _
  %s8 = ssub.s32 1, %s6
  %s9 = scalar_select 0, %s8, %s6
  $region1: #{tpu_custom_call.1} parent=0
    #allocation2 [shape = 'u8[1024]{0}', space=vmem, size = 0x400, scoped, tag = 'output window, operand 0, single buffered']
    #allocation3 [shape = 's32[1]{0}', space=sflag, size = 0x4, scoped, tag = 'scoped memory for tpu_custom_call.1']
    %10 = vsyncpa [#allocation3], 0
    // Predicated region
    $region2: #{tpu_custom_call.1} parent=1 // pred_check
      _
    $region3: #{tpu_custom_call.1} parent=1 // pred_check_branch
      %12 = sbr.rel (0) target = $region5
    $region4: #{tpu_custom_call.1} parent=1 // pred_region
      _
    $region5: #{tpu_custom_call.1} parent=1 // pred_fallthru
      _
    // Predicated region
    $region6: #{tpu_custom_call.1} parent=1 // pred_check
      _
    $region7: #{tpu_custom_call.1} parent=1 // pred_check_branch
      %14 = sbr.rel (0) target = $region9
    $region8: #{tpu_custom_call.1} parent=1 // pred_region
      _
    $region9: #{tpu_custom_call.1} parent=1 // pred_fallthru
      _
    // Predicated region
    $region10: #{tpu_custom_call.1} parent=1 // pred_check
      _
    $region11: #{tpu_custom_call.1} parent=1 // pred_check_branch
      %16 = sbr.rel (0) target = $region13
    $region12: #{tpu_custom_call.1} parent=1 // pred_region
      _
    $region13: #{tpu_custom_call.1} parent=1 // pred_fallthru
      _
    // Predicated region
    $region14: #{tpu_custom_call.1} parent=1 // pred_check
      _
    $region15: #{tpu_custom_call.1} parent=1 // pred_check_branch
      %18 = sbr.rel (0) target = $region17
    $region16: #{tpu_custom_call.1} parent=1 // pred_region
      _
    $region17: #{tpu_custom_call.1} parent=1 // pred_fallthru
      _
    // Predicated region
    $region18: #{tpu_custom_call.1} parent=1 // pred_check
      _
    $region19: #{tpu_custom_call.1} parent=1 // pred_check_branch
      %20 = sbr.rel (0) target = $region21
    $region20: #{tpu_custom_call.1} parent=1 // pred_region
      _
    $region21: #{tpu_custom_call.1} parent=1 // pred_fallthru
      _
    %v21 = vld [vmem:[%s0] sm:$0x7]
    %v22 = vld [vmem:[%s1] sm:$0xff]
    %v23 = vld [vmem:[%s1 + $0x8] sm:$0xff]
    %v24 = vld [vmem:[%s1 + $0x10] sm:$0xff]
    %v25 = vld [vmem:[%s1 + $0x18] sm:$0xff]
    %v26 = vld [vmem:[%s1 + $0x20] sm:$0xff]
    %v27 = vld [vmem:[%s1 + $0x28] sm:$0xff]
    %v28 = vld [vmem:[%s1 + $0x30] sm:$0xff]
    %v29 = vld [vmem:[%s1 + $0x38] sm:$0xff]
    %v30 = vld [vmem:[%s1 + $0x40] sm:$0xff]
    %v31 = vld [vmem:[%s1 + $0x48] sm:$0xff]
    %v32 = vld [vmem:[%s1 + $0x50] sm:$0xff]
    %v33 = vld [vmem:[%s1 + $0x58] sm:$0xff]
    %v34 = vld [vmem:[%s1 + $0x60] sm:$0xf]
    %v35 = vld [vmem:[%s2] sm:$0xff]
    %v36 = vld [vmem:[%s2 + $0x8] sm:$0xff]
    %v37 = vld [vmem:[%s2 + $0x10] sm:$0xff]
    %v38 = vld [vmem:[%s2 + $0x18] sm:$0xff]
    %v39 = vld [vmem:[%s2 + $0x20] sm:$0xff]
    %v40 = vld [vmem:[%s2 + $0x28] sm:$0xff]
    %v41 = vld [vmem:[%s2 + $0x30] sm:$0xff]
    %v42 = vld [vmem:[%s2 + $0x38] sm:$0xff]
    %v43 = vld [vmem:[%s2 + $0x40] sm:$0xff]
    %v44 = vld [vmem:[%s2 + $0x48] sm:$0xff]
    %v45 = vld [vmem:[%s2 + $0x50] sm:$0xff]
    %v46 = vld [vmem:[%s2 + $0x58] sm:$0xff]
    %v47 = vld [vmem:[%s2 + $0x60] sm:$0xf]
    %49 = vset.pattern.permute.xlu0 0
    %50 = vperm.xlu0 %49, %v22
    %v51 = vpop.permute.xlu0 %50
    %54 = vset.pattern.permute.xlu0 0
    %55 = vperm.xlu0 %54, %v23
    %v56 = vpop.permute.xlu0 %55
    %59 = vset.pattern.permute.xlu0 0
    %60 = vperm.xlu0 %59, %v24
    %v61 = vpop.permute.xlu0 %60
    %64 = vset.pattern.permute.xlu0 0
    %65 = vperm.xlu0 %64, %v25
    %v66 = vpop.permute.xlu0 %65
    %69 = vset.pattern.permute.xlu0 0
    %70 = vperm.xlu0 %69, %v26
    %v71 = vpop.permute.xlu0 %70
    %74 = vset.pattern.permute.xlu0 0
    %75 = vperm.xlu0 %74, %v27
    %v76 = vpop.permute.xlu0 %75
    %79 = vset.pattern.permute.xlu0 0
    %80 = vperm.xlu0 %79, %v28
    %v81 = vpop.permute.xlu0 %80
    %84 = vset.pattern.permute.xlu0 0
    %85 = vperm.xlu0 %84, %v29
    %v86 = vpop.permute.xlu0 %85
    %89 = vset.pattern.permute.xlu0 0
    %90 = vperm.xlu0 %89, %v30
    %v91 = vpop.permute.xlu0 %90
    %94 = vset.pattern.permute.xlu0 0
    %95 = vperm.xlu0 %94, %v31
    %v96 = vpop.permute.xlu0 %95
    %99 = vset.pattern.permute.xlu0 0
    %100 = vperm.xlu0 %99, %v32
    %v101 = vpop.permute.xlu0 %100
    %104 = vset.pattern.permute.xlu0 0
    %105 = vperm.xlu0 %104, %v33
    %v106 = vpop.permute.xlu0 %105
    %109 = vset.pattern.permute.xlu0 0
    %110 = vperm.xlu0 %109, %v34
    %v111 = vpop.permute.xlu0 %110
    %v113 = vlaneseq
    %v114 = vshrl.u32 %v113, 7
    %v115 = vsub.s32 0, %v114
    %v116 = vrot.slane %v21, %v115
    %v117 = vmul.f32 %v51, %v116
    %v118 = vmul.f32 %v56, %v116
    %v119 = vmul.f32 %v61, %v116
    %v120 = vmul.f32 %v66, %v116
    %v121 = vmul.f32 %v71, %v116
    %v122 = vmul.f32 %v76, %v116
    %v123 = vmul.f32 %v81, %v116
    %v124 = vmul.f32 %v86, %v116
    %v125 = vmul.f32 %v91, %v116
    %v126 = vmul.f32 %v96, %v116
    %v127 = vmul.f32 %v101, %v116
    %v128 = vmul.f32 %v106, %v116
    %v129 = vmul.f32 %v111, %v116
    %131 = vset.pattern.permute.xlu0 0
    %132 = vperm.xlu0 %131, %v35
    %v133 = vpop.permute.xlu0 %132
    %136 = vset.pattern.permute.xlu0 0
    %137 = vperm.xlu0 %136, %v36
    %v138 = vpop.permute.xlu0 %137
    %141 = vset.pattern.permute.xlu0 0
    %142 = vperm.xlu0 %141, %v37
    %v143 = vpop.permute.xlu0 %142
    %146 = vset.pattern.permute.xlu0 0
    %147 = vperm.xlu0 %146, %v38
    %v148 = vpop.permute.xlu0 %147
    %151 = vset.pattern.permute.xlu0 0
    %152 = vperm.xlu0 %151, %v39
    %v153 = vpop.permute.xlu0 %152
    %156 = vset.pattern.permute.xlu0 0
    %157 = vperm.xlu0 %156, %v40
    %v158 = vpop.permute.xlu0 %157
    %161 = vset.pattern.permute.xlu0 0
    %162 = vperm.xlu0 %161, %v41
    %v163 = vpop.permute.xlu0 %162
    %166 = vset.pattern.permute.xlu0 0
    %167 = vperm.xlu0 %166, %v42
    %v168 = vpop.permute.xlu0 %167
    %171 = vset.pattern.permute.xlu0 0
    %172 = vperm.xlu0 %171, %v43
    %v173 = vpop.permute.xlu0 %172
    %176 = vset.pattern.permute.xlu0 0
    %177 = vperm.xlu0 %176, %v44
    %v178 = vpop.permute.xlu0 %177
    %181 = vset.pattern.permute.xlu0 0
    %182 = vperm.xlu0 %181, %v45
    %v183 = vpop.permute.xlu0 %182
    %186 = vset.pattern.permute.xlu0 0
    %187 = vperm.xlu0 %186, %v46
    %v188 = vpop.permute.xlu0 %187
    %191 = vset.pattern.permute.xlu0 0
    %192 = vperm.xlu0 %191, %v47
    %v193 = vpop.permute.xlu0 %192
    %v195 = vadd.f32 %v133, %v117
    %v196 = vadd.f32 %v138, %v118
    %v197 = vadd.f32 %v143, %v119
    %v198 = vadd.f32 %v148, %v120
    %v199 = vadd.f32 %v153, %v121
    %v200 = vadd.f32 %v158, %v122
    %v201 = vadd.f32 %v163, %v123
    %v202 = vadd.f32 %v168, %v124
    %v203 = vadd.f32 %v173, %v125
    %v204 = vadd.f32 %v178, %v126
    %v205 = vadd.f32 %v183, %v127
    %v206 = vadd.f32 %v188, %v128
    %v207 = vadd.f32 %v193, %v129
    %208 = vset.pattern.permute.xlu0 1
    %209 = vperm.xlu0 %208, %v22
    %v210 = vpop.permute.xlu0 %209
    %212 = vset.pattern.permute.xlu0 1
    %213 = vperm.xlu0 %212, %v23
    %v214 = vpop.permute.xlu0 %213
    %216 = vset.pattern.permute.xlu0 1
    %217 = vperm.xlu0 %216, %v24
    %v218 = vpop.permute.xlu0 %217
    %220 = vset.pattern.permute.xlu0 1
    %221 = vperm.xlu0 %220, %v25
    %v222 = vpop.permute.xlu0 %221
    %224 = vset.pattern.permute.xlu0 1
    %225 = vperm.xlu0 %224, %v26
    %v226 = vpop.permute.xlu0 %225
    %228 = vset.pattern.permute.xlu0 1
    %229 = vperm.xlu0 %228, %v27
    %v230 = vpop.permute.xlu0 %229
    %232 = vset.pattern.permute.xlu0 1
    %233 = vperm.xlu0 %232, %v28
    %v234 = vpop.permute.xlu0 %233
    %236 = vset.pattern.permute.xlu0 1
    %237 = vperm.xlu0 %236, %v29
    %v238 = vpop.permute.xlu0 %237
    %240 = vset.pattern.permute.xlu0 1
    %241 = vperm.xlu0 %240, %v30
    %v242 = vpop.permute.xlu0 %241
    %244 = vset.pattern.permute.xlu0 1
    %245 = vperm.xlu0 %244, %v31
    %v246 = vpop.permute.xlu0 %245
    %248 = vset.pattern.permute.xlu0 1
    %249 = vperm.xlu0 %248, %v32
    %v250 = vpop.permute.xlu0 %249
    %252 = vset.pattern.permute.xlu0 1
    %253 = vperm.xlu0 %252, %v33
    %v254 = vpop.permute.xlu0 %253
    %256 = vset.pattern.permute.xlu0 1
    %257 = vperm.xlu0 %256, %v34
    %v258 = vpop.permute.xlu0 %257
    %v260 = vlaneseq
    %v261 = vshrl.u32 %v260, 7
    %v262 = vsub.s32 1, %v261
    %v263 = vrot.slane %v21, %v262
    %v264 = vmul.f32 %v210, %v263
    %v265 = vmul.f32 %v214, %v263
    %v266 = vmul.f32 %v218, %v263
    %v267 = vmul.f32 %v222, %v263
    %v268 = vmul.f32 %v226, %v263
    %v269 = vmul.f32 %v230, %v263
    %v270 = vmul.f32 %v234, %v263
    %v271 = vmul.f32 %v238, %v263
    %v272 = vmul.f32 %v242, %v263
    %v273 = vmul.f32 %v246, %v263
    %v274 = vmul.f32 %v250, %v263
    %v275 = vmul.f32 %v254, %v263
    %v276 = vmul.f32 %v258, %v263
    %v277 = vadd.f32 %v195, %v264
    %v278 = vadd.f32 %v196, %v265
    %v279 = vadd.f32 %v197, %v266
    %v280 = vadd.f32 %v198, %v267
    %v281 = vadd.f32 %v199, %v268
    %v282 = vadd.f32 %v200, %v269
    %v283 = vadd.f32 %v201, %v270
    %v284 = vadd.f32 %v202, %v271
    %v285 = vadd.f32 %v203, %v272
    %v286 = vadd.f32 %v204, %v273
    %v287 = vadd.f32 %v205, %v274
    %v288 = vadd.f32 %v206, %v275
    %v289 = vadd.f32 %v207, %v276
    %290 = vset.pattern.permute.xlu0 2
    %291 = vperm.xlu0 %290, %v22
    %v292 = vpop.permute.xlu0 %291
    %294 = vset.pattern.permute.xlu0 2
    %295 = vperm.xlu0 %294, %v23
    %v296 = vpop.permute.xlu0 %295
    %298 = vset.pattern.permute.xlu0 2
    %299 = vperm.xlu0 %298, %v24
    %v300 = vpop.permute.xlu0 %299
    %302 = vset.pattern.permute.xlu0 2
    %303 = vperm.xlu0 %302, %v25
    %v304 = vpop.permute.xlu0 %303
    %306 = vset.pattern.permute.xlu0 2
    %307 = vperm.xlu0 %306, %v26
    %v308 = vpop.permute.xlu0 %307
    %310 = vset.pattern.permute.xlu0 2
    %311 = vperm.xlu0 %310, %v27
    %v312 = vpop.permute.xlu0 %311
    %314 = vset.pattern.permute.xlu0 2
    %315 = vperm.xlu0 %314, %v28
    %v316 = vpop.permute.xlu0 %315
    %318 = vset.pattern.permute.xlu0 2
    %319 = vperm.xlu0 %318, %v29
    %v320 = vpop.permute.xlu0 %319
    %322 = vset.pattern.permute.xlu0 2
    %323 = vperm.xlu0 %322, %v30
    %v324 = vpop.permute.xlu0 %323
    %326 = vset.pattern.permute.xlu0 2
    %327 = vperm.xlu0 %326, %v31
    %v328 = vpop.permute.xlu0 %327
    %330 = vset.pattern.permute.xlu0 2
    %331 = vperm.xlu0 %330, %v32
    %v332 = vpop.permute.xlu0 %331
    %334 = vset.pattern.permute.xlu0 2
    %335 = vperm.xlu0 %334, %v33
    %v336 = vpop.permute.xlu0 %335
    %338 = vset.pattern.permute.xlu0 2
    %339 = vperm.xlu0 %338, %v34
    %v340 = vpop.permute.xlu0 %339
    %v342 = vlaneseq
    %v343 = vshrl.u32 %v342, 7
    %v344 = vsub.s32 2, %v343
    %v345 = vrot.slane %v21, %v344
    %v346 = vmul.f32 %v292, %v345
    %v347 = vmul.f32 %v296, %v345
    %v348 = vmul.f32 %v300, %v345
    %v349 = vmul.f32 %v304, %v345
    %v350 = vmul.f32 %v308, %v345
    %v351 = vmul.f32 %v312, %v345
    %v352 = vmul.f32 %v316, %v345
    %v353 = vmul.f32 %v320, %v345
    %v354 = vmul.f32 %v324, %v345
    %v355 = vmul.f32 %v328, %v345
    %v356 = vmul.f32 %v332, %v345
    %v357 = vmul.f32 %v336, %v345
    %v358 = vmul.f32 %v340, %v345
    %v359 = vadd.f32 %v277, %v346
    %v360 = vadd.f32 %v278, %v347
    %v361 = vadd.f32 %v279, %v348
    %v362 = vadd.f32 %v280, %v349
    %v363 = vadd.f32 %v281, %v350
    %v364 = vadd.f32 %v282, %v351
    %v365 = vadd.f32 %v283, %v352
    %v366 = vadd.f32 %v284, %v353
    %v367 = vadd.f32 %v285, %v354
    %v368 = vadd.f32 %v286, %v355
    %v369 = vadd.f32 %v287, %v356
    %v370 = vadd.f32 %v288, %v357
    %v371 = vadd.f32 %v289, %v358
    %v372 = vmax.f32 %v359, 0.0
    %v373 = vmax.f32 %v360, 0.0
    %v374 = vmax.f32 %v361, 0.0
    %v375 = vmax.f32 %v362, 0.0
    %v376 = vmax.f32 %v363, 0.0
    %v377 = vmax.f32 %v364, 0.0
    %v378 = vmax.f32 %v365, 0.0
    %v379 = vmax.f32 %v366, 0.0
    %v380 = vmax.f32 %v367, 0.0
    %v381 = vmax.f32 %v368, 0.0
    %v382 = vmax.f32 %v369, 0.0
    %v383 = vmax.f32 %v370, 0.0
    %v384 = vmax.f32 %v371, 0.0
    %v385 = vld [vmem:[%s3] sm:$0x3]
    %v386 = vld [vmem:[%s4] sm:$0x3]
    %388 = vset.pattern.permute.xlu0 0
    %389 = vperm.xlu0 %388, %v386
    %v390 = vpop.permute.xlu0 %389
    %vm392 = vcmask 818176
    %v394 = vsel %vm392, %v385, 0
    %vm396 = vcmask 1043456
    %v398 = vsel %vm396, %v384, 0
    %400 = vmatprep.subr.mxu0 0.0
    %401 = vmatpush1.msra.mxu0 %v372
    %402 = vmatprep.subr.mxu0 0.0
    %403 = vmatpush1.msra.mxu0 %v373
    %404 = vmatprep.subr.mxu0 0.0
    %405 = vmatpush1.msra.mxu0 %v374
    %406 = vmatprep.subr.mxu0 0.0
    %407 = vmatpush1.msra.mxu0 %v375
    %408 = vmatprep.subr.mxu0 0.0
    %409 = vmatpush1.msra.mxu0 %v376
    %410 = vmatprep.subr.mxu0 0.0
    %411 = vmatpush1.msra.mxu0 %v377
    %412 = vmatprep.subr.mxu0 0.0
    %413 = vmatpush1.msra.mxu0 %v378
    %414 = vmatprep.subr.mxu0 0.0
    %415 = vmatpush1.msra.mxu0 %v379
    %416 = vmatprep.subr.mxu0 0.0
    %417 = vmatpush1.msra.mxu0 %v380
    %418 = vmatprep.subr.mxu0 0.0
    %419 = vmatpush1.msra.mxu0 %v381
    %420 = vmatprep.subr.mxu0 0.0
    %421 = vmatpush1.msra.mxu0 %v382
    %422 = vmatprep.subr.mxu0 0.0
    %423 = vmatpush1.msra.mxu0 %v383
    %424 = vmatprep.subr.mxu0 0.0
    %425 = vmatpush1.msra.mxu0 %v398
    %426 = vmatprep.subr.mxu0 0.0
    %427 = vmatpush1.msra.mxu0 0.0
    %428 = vmatprep.subr.mxu0 0.0
    %429 = vmatpush1.msra.mxu0 0.0
    %430 = vmatprep.subr.mxu0 0.0
    %431 = vmatpush1.msra.mxu0 0.0
    %432 = vmatprep.subr.mxu0 0.0
    %433 = vmatpush1.msra.mxu0 0.0
    %434 = vmatprep.subr.mxu0 0.0
    %435 = vmatpush1.msra.mxu0 0.0
    %436 = vmatprep.subr.mxu0 0.0
    %437 = vmatpush1.msra.mxu0 0.0
    %438 = vmatprep.subr.mxu0 0.0
    %439 = vmatpush1.msra.mxu0 0.0
    %440 = vmatprep.subr.mxu0 0.0
    %441 = vmatpush1.msra.mxu0 0.0
    %442 = vmatprep.subr.mxu0 0.0
    %443 = vmatpush1.msra.mxu0 0.0
    %444 = vmatprep.subr.mxu0 0.0
    %445 = vmatpush1.msra.mxu0 0.0
    %446 = vmatprep.subr.mxu0 0.0
    %447 = vmatpush1.msra.mxu0 0.0
    %448 = vmatprep.subr.mxu0 0.0
    %449 = vmatpush1.msra.mxu0 0.0
    %450 = vmatprep.subr.mxu0 0.0
    %451 = vmatpush1.msra.mxu0 0.0
    %452 = vmatprep.subr.mxu0 0.0
    %453 = vmatpush1.msra.mxu0 0.0
    %454 = vmatprep.subr.mxu0 0.0
    %455 = vmatpush1.msra.mxu0 0.0
    %456 = vmatprep.subr.mxu0 0.0
    %457 = vmatpush1.msra.mxu0 0.0
    %458 = vmatprep.subr.mxu0 0.0
    %459 = vmatpush1.msra.mxu0 0.0
    %460 = vmatprep.subr.mxu0 0.0
    %461 = vmatpush1.msra.mxu0 0.0
    %462 = vmatprep.subr.mxu0 0.0
    %463 = vmatpush1.msra.mxu0 0.0
    %464 = vmatprep.mubr.f32.mxu0 0.0
    %465 = vmatmul.mubr.f32.gmra.mrb[0].mxu0 %v394
    %v466 = vpop.f32.mrb[0].mxu0
    %v467 = vadd.f32 %v390, %v466
    %v468 = vpop.f32.mrb[0].mxu0
    %469 = vdwg.mxu0
    %v470 = vtanh.pop %v467
    %v471 = vmul.f32 %v470, 2.0
    %472 = vst [vmem:[#allocation2] sm:$0x1] %v471
    %v473 = vxor.u32 %v467, 2147483648
    %v474 = vmul.f32 %v473, 1.442695
    %v475 = vpow.pop %v474
    %v476 = vadd.f32 %v475, 1.0
    %v477 = vrcp.pop %v476
    %v478 = vmul.f32 1.0, %v477
    %479 = vst [vmem:[#allocation2] sm:$0x2] %v478
    // Predicated region
    $region22: #{tpu_custom_call.1} parent=1 // pred_check
      _
    $region23: #{tpu_custom_call.1} parent=1 // pred_check_branch
      %481 = sbr.rel (0) target = $region25
    $region24: #{tpu_custom_call.1} parent=1 // pred_region
      %s483 = ssub.s32 32, 32
      %484 = vsyncadd [#allocation3], %s483
      %s486 = sshll.u32 [#allocation2], 4
      %s487 = int_to_ptr.vmem [resolvable:$true] %s486
      %489 = dma.vmem_to_hbm [thread:$0]  %s487, 32, %s5, [#allocation3]
    $region25: #{tpu_custom_call.1} parent=1 // pred_fallthru
      _
    // Predicated region
    $region26: #{tpu_custom_call.1} parent=1 // pred_check
      _
    $region27: #{tpu_custom_call.1} parent=1 // pred_check_branch
      %491 = sbr.rel (0) target = $region29
    $region28: #{tpu_custom_call.1} parent=1 // pred_region
      %492 = dma.done [#allocation3], 32
    $region29: #{tpu_custom_call.1} parent=1 // pred_fallthru
      _
    %493 = vsyncpa [#allocation3], 1

</llo_original>
